<compile_context>
chip_gen: v6e
topology: v6e:2x2x1
jax: 0.10.0
libtpu: 0.0.40
codegen_flags: <defaults>
</compile_context>

<pallas_src>
import functools

import jax
import jax.numpy as jnp
from jax.experimental import pallas as pl
from jax.experimental.pallas import tpu as pltpu


def _round_up(x, m):
    return (x + m - 1) // m * m


# ----------------------------------------------------------------------------
# Kernel: one grid step over a TE-node tile.  Feature-major, lane-dense layout:
#   xs_ref : (IS,      TE)   bf16   scalar features, nodes on the 128-lane axis
#   xv_ref : (3*C,     TE)   bf16   vector features  [comp0 chans; comp1; comp2]
#   w_ref  : (rows,    W)    bf16   all weights packed into ONE slab
#   out_ref: (OS+3*OV, TE)   bf16   fused lane-dense output slab (single store)
# ----------------------------------------------------------------------------
def _gdb_linear_kernel(dims, xs_ref, xv_ref, w_ref, out_ref):
    f32 = jnp.float32
    C, H, IS, SH, OS, OV = (dims["C"], dims["H"], dims["IS"],
                            dims["SH"], dims["OS"], dims["OV"])
    off = dims["off"]

    # Static views into the packed weight slab (no data-dependent indexing).
    w1bd = w_ref[off["w1"]: off["w1"] + 3 * H, :3 * C]   # blockdiag(w1,w1,w1)   (3H, 3C)
    w2bd = w_ref[off["w2"]: off["w2"] + 3 * OV, :3 * H]  # blockdiag(w2,w2,w2)   (3OV, 3H)
    ws1  = w_ref[off["ws1"]: off["ws1"] + SH, :IS]       # lin_scalar_1          (SH, IS)
    ws2  = w_ref[off["ws2"]: off["ws2"] + OS, :H + SH]   # lin_scalar_2          (OS, H+SH)
    wg   = w_ref[off["wg"]:  off["wg"] + OV, :OS]        # scalar_to_vector_gates (OV, OS)
    bg   = w_ref[off["bg"]:  off["bg"] + OV, :1]         # gate bias (column)    (OV, 1)

    xs = xs_ref[...]                                     # (IS,  TE) bf16
    xv = xv_ref[...]                                     # (3C,  TE) bf16

    # --- VNLinear #1 (lin_vector): all 3 spatial components in ONE MXU push ---
    inter = jnp.dot(w1bd, xv, preferred_element_type=f32)          # (3H, TE) f32

    # Per-channel L2 norm over the 3 spatial components (f32).
    norm_sq = (jnp.square(inter[:H])
               + jnp.square(inter[H:2 * H])
               + jnp.square(inter[2 * H:]))
    # TODO(synk): add an eps inside sqrt if a backward pass is ever added.
    vnorm = jnp.sqrt(norm_sq)                                      # (H, TE) f32

    # --- scalar path: lin_scalar_1, then lin_scalar_2 on cat([vnorm, z_sca]) ---
    z_sca = jnp.dot(ws1, xs, preferred_element_type=f32)           # (SH, TE) f32
    cat = jnp.concatenate([vnorm, z_sca], axis=0)                  # (H+SH, TE) f32
    out_sca = jnp.dot(ws2.astype(f32), cat,
                      preferred_element_type=f32)                  # (OS, TE) f32

    # --- gating (f32 sigmoid) ---
    gate = jax.nn.sigmoid(
        jnp.dot(wg.astype(f32), out_sca, preferred_element_type=f32)
        + bg.astype(f32))                                          # (OV, TE) f32
    gate3 = jnp.concatenate([gate, gate, gate], axis=0)            # (3OV, TE)

    # --- VNLinear #2 (lin_vector2): one MXU push, already stacked over xyz ---
    out_vec = gate3 * jnp.dot(w2bd.astype(f32), inter,
                              preferred_element_type=f32)          # (3OV, TE) f32

    # Single fused lane-dense store, cast to bf16 once.
    out_ref[...] = jnp.concatenate([out_sca, out_vec],
                                   axis=0).astype(out_ref.dtype)


# ----------------------------------------------------------------------------
# Parameters (PyTorch Linear-style init) and weight-slab packing
# ----------------------------------------------------------------------------
def init_gdb_linear_params(key, in_scalar, in_vector, out_scalar, out_vector,
                           bottleneck=(1, 1)):
    if isinstance(bottleneck, int):
        sca_b = vec_b = bottleneck
    else:
        sca_b, vec_b = bottleneck
    assert in_vector % vec_b == 0 and in_scalar % sca_b == 0
    sca_hidden_dim = in_scalar // sca_b if sca_b > 1 else max(in_vector, out_vector)
    hidden_dim = in_vector // vec_b if vec_b > 1 else max(in_vector, out_vector)

    def lin_w(k, out_f, in_f):
        b = 1.0 / (in_f ** 0.5)
        return jax.random.uniform(k, (out_f, in_f), jnp.float32, -b, b)

    ks = jax.random.split(key, 6)
    return dict(
        w_lin_vector=lin_w(ks[0], hidden_dim, in_vector),            # (H, C)
        w_lin_vector2=lin_w(ks[1], out_vector, hidden_dim),          # (OV, H)
        w_lin_scalar_1=lin_w(ks[2], sca_hidden_dim, in_scalar),      # (SH, IS)
        w_lin_scalar_2=lin_w(ks[3], out_scalar,
                             hidden_dim + sca_hidden_dim),           # (OS, H+SH)
        w_gates=lin_w(ks[4], out_vector, out_scalar),                # (OV, OS)
        b_gates=jax.random.uniform(ks[5], (out_vector,), jnp.float32,
                                   -1.0 / out_scalar ** 0.5,
                                   1.0 / out_scalar ** 0.5),
        dims=dict(IS=in_scalar, C=in_vector, H=hidden_dim, SH=sca_hidden_dim,
                  OS=out_scalar, OV=out_vector),
    )


def _blkdiag3(w):
    o, i = w.shape
    z = jnp.zeros((o, i), w.dtype)
    return jnp.concatenate([
        jnp.concatenate([w, z, z], axis=1),
        jnp.concatenate([z, w, z], axis=1),
        jnp.concatenate([z, z, w], axis=1)], axis=0)


def pack_gdb_linear(params, io_dtype=jnp.bfloat16):
    """Pack all weights/bias into one (rows, W) slab (16-row aligned blocks)."""
    d = dict(params["dims"])
    OV = d["OV"]
    blocks = [
        ("w1",  _blkdiag3(params["w_lin_vector"])),    # (3H, 3C)
        ("w2",  _blkdiag3(params["w_lin_vector2"])),   # (3OV, 3H)
        ("ws1", params["w_lin_scalar_1"]),             # (SH, IS)
        ("ws2", params["w_lin_scalar_2"]),             # (OS, H+SH)
        ("wg",  params["w_gates"]),                    # (OV, OS)
        ("bg",  params["b_gates"].reshape(OV, 1)),     # (OV, 1)
    ]
    width = _round_up(max(b.shape[1] for _, b in blocks), 128)
    row_align = 16                       # bf16 sublane packing: (16,128) tiles
    off, pieces, r = {}, [], 0
    for name, w in blocks:
        off[name] = r
        rows = _round_up(w.shape[0], row_align)
        pieces.append(jnp.pad(w.astype(jnp.float32),
                              ((0, rows - w.shape[0]), (0, width - w.shape[1]))))
        r += rows
    slab = jnp.concatenate(pieces, axis=0).astype(io_dtype)
    d["off"] = off
    return dict(slab=slab, dims=d)


# ----------------------------------------------------------------------------
# Tile planner + pallas_call wrappers
# ----------------------------------------------------------------------------
def _plan_tile(n, tile_nodes):
    n128 = _round_up(max(n, 1), 128)
    te = min(_round_up(tile_nodes, 128), n128)
    # Prefer >= 2 grid steps so ("parallel",) shards across both TensorCores.
    if te == n128 and n128 >= 256:
        te = _round_up(n128 // 2, 128)
    n_pad = _round_up(n128, te)
    return te, n_pad


def _gdb_linear_pallas(packed, xs_fm, xv_fm, te):
    """Core feature-major entry point.

    xs_fm: (IS, Np) bf16, xv_fm: (3C, Np) bf16, Np a multiple of te (zero-pad).
    Returns the fused (OS + 3*OV, Np) bf16 output slab.
    """
    d = packed["dims"]
    slab = packed["slab"]
    IS, C, OS, OV = d["IS"], d["C"], d["OS"], d["OV"]
    n_pad = xs_fm.shape[1]
    assert xs_fm.shape == (IS, n_pad) and xv_fm.shape == (3 * C, n_pad)
    assert n_pad % te == 0
    out_rows = OS + 3 * OV

    kernel = functools.partial(_gdb_linear_kernel, d)
    return pl.pallas_call(
        kernel,
        out_shape=jax.ShapeDtypeStruct((out_rows, n_pad), xs_fm.dtype),
        grid=(n_pad // te,),
        in_specs=[
            pl.BlockSpec((IS, te), lambda i: (0, i)),        # scalar features
            pl.BlockSpec((3 * C, te), lambda i: (0, i)),     # flat vector features
            pl.BlockSpec(slab.shape, lambda i: (0, 0)),      # packed weight slab
        ],
        out_specs=pl.BlockSpec((out_rows, te), lambda i: (0, i)),
        compiler_params=pltpu.CompilerParams(
            dimension_semantics=("parallel",)),
    )(xs_fm, xv_fm, slab)


def gdb_linear_forward(packed, feat_scalar, feat_vector, tile_nodes=2048):
    """Torch-layout convenience wrapper.

    feat_scalar: (N, IS) ;  feat_vector: (N, C, 3)
    returns (out_scalar (N, OS), out_vector (N, OV, 3)) in bf16.
    """
    d = packed["dims"]
    C, OS, OV = d["C"], d["OS"], d["OV"]
    N = feat_scalar.shape[0]
    te, n_pad = _plan_tile(N, tile_nodes)
    io_dtype = packed["slab"].dtype

    # TODO(synk): in the surrounding model keep features in this feature-major
    # bf16 layout end-to-end; each transpose/pad below is a full extra HBM pass
    # and exists only so this wrapper accepts the torch (node-major) layout.
    xs = jnp.pad(feat_scalar.T.astype(io_dtype),
                 ((0, 0), (0, n_pad - N)))                          # (IS, n_pad)
    xv = jnp.pad(jnp.transpose(feat_vector, (2, 1, 0)).reshape(3 * C, N)
                 .astype(io_dtype),
                 ((0, 0), (0, n_pad - N)))                          # (3C, n_pad)

    fused = _gdb_linear_pallas(packed, xs, xv, te)

    out_scalar = fused[:OS, :N].T                                   # (N, OS)
    out_vector = jnp.transpose(fused[OS:, :N].reshape(3, OV, N),
                               (2, 1, 0))                           # (N, OV, 3)
    return out_scalar, out_vector


# ----------------------------------------------------------------------------
# Pure-JAX reference (mirrors the PyTorch module exactly) and test driver
# ----------------------------------------------------------------------------
def gdb_linear_ref(params, feat_scalar, feat_vector):
    w1, w2 = params["w_lin_vector"], params["w_lin_vector2"]
    ws1, ws2 = params["w_lin_scalar_1"], params["w_lin_scalar_2"]
    wg, bg = params["w_gates"], params["b_gates"]
    inter = jnp.einsum("hc,ncx->nhx", w1, feat_vector)              # VNLinear #1
    vnorm = jnp.sqrt(jnp.sum(inter * inter, axis=-1))               # norm over xyz
    z = feat_scalar @ ws1.T
    out_sca = jnp.concatenate([vnorm, z], axis=-1) @ ws2.T
    gate = jax.nn.sigmoid(out_sca @ wg.T + bg)[:, :, None]
    out_vec = gate * jnp.einsum("oh,nhx->nox", w2, inter)           # VNLinear #2
    return out_sca, out_vec


if __name__ == "__main__":
    key = jax.random.PRNGKey(0)
    in_scalar, in_vector = 32, 8        # (scalar channels, vector channels)
    out_scalar, out_vector = 4, 4       # e.g. num_heads

    k_par, k_s, k_v = jax.random.split(key, 3)
    params = init_gdb_linear_params(k_par, in_scalar, in_vector,
                                    out_scalar, out_vector, bottleneck=(1, 1))
    packed = pack_gdb_linear(params)    # pack once, reuse across calls

    ok = True
    for N in (1000, 6000):              # exercises 2-step grid & big-tile path
        k_s, k_v = jax.random.split(jax.random.fold_in(key, N))
        feat_scalar = jax.random.normal(k_s, (N, in_scalar), jnp.float32)
        feat_vector = jax.random.normal(k_v, (N, in_vector, 3), jnp.float32)

        out_sca, out_vec = gdb_linear_forward(packed, feat_scalar, feat_vector,
                                              tile_nodes=2048)
        jax.block_until_ready((out_sca, out_vec))

        ref_sca, ref_vec = gdb_linear_ref(params, feat_scalar, feat_vector)
        assert out_sca.shape == (N, out_scalar)
        assert out_vec.shape == (N, out_vector, 3)
        ok &= bool(jnp.all(jnp.isfinite(out_sca)))
        ok &= bool(jnp.all(jnp.isfinite(out_vec)))
        # bf16 I/O with f32 accumulation -> tolerance covers bf16 rounding.
        ok &= bool(jnp.allclose(out_sca.astype(jnp.float32), ref_sca,
                                atol=3e-2, rtol=3e-2))
        ok &= bool(jnp.allclose(out_vec.astype(jnp.float32), ref_vec,
                                atol=3e-2, rtol=3e-2))

    assert ok
    print("KERNEL_OK")
</pallas_src>

<mosaic_0001>
module attributes {stable_mosaic.version = 11 : i64} {
  func.func @_gdb_linear_kernel(%arg0: i32, %arg1: memref<32x512xbf16, #tpu.memory_space<vmem>>, %arg2: memref<24x512xbf16, #tpu.memory_space<vmem>>, %arg3: memref<112x128xbf16, #tpu.memory_space<vmem>>, %arg4: memref<16x512xbf16, #tpu.memory_space<vmem>>) attributes {dimension_semantics = [#tpu.dimension_semantics<parallel>], iteration_bounds = array<i64: 2>, scalar_prefetch = 0 : i64, scratch_operands = 0 : i64, tpu.core_type = #tpu.core_type<tc>, window_params = [{transform_indices = @transform_0, window_bounds = array<i64: 32, 512>}, {transform_indices = @transform_1, window_bounds = array<i64: 24, 512>}, {pipeline_mode = #tpu.pipeline_mode<synchronous>, transform_indices = @transform_2, window_bounds = array<i64: 112, 128>}, {transform_indices = @transform_3, window_bounds = array<i64: 16, 512>}]} {
    %c0 = arith.constant 0 : index
    %c0_0 = arith.constant 0 : index
    %0 = vector.load %arg3[%c0, %c0_0] : memref<112x128xbf16, #tpu.memory_space<vmem>>, vector<24x24xbf16>
    %c32 = arith.constant 32 : index
    %c0_1 = arith.constant 0 : index
    %1 = vector.load %arg3[%c32, %c0_1] : memref<112x128xbf16, #tpu.memory_space<vmem>>, vector<12x24xbf16>
    %c48 = arith.constant 48 : index
    %c0_2 = arith.constant 0 : index
    %2 = vector.load %arg3[%c48, %c0_2] : memref<112x128xbf16, #tpu.memory_space<vmem>>, vector<8x32xbf16>
    %c64 = arith.constant 64 : index
    %c0_3 = arith.constant 0 : index
    %3 = vector.load %arg3[%c64, %c0_3] : memref<112x128xbf16, #tpu.memory_space<vmem>>, vector<4x16xbf16>
    %c80 = arith.constant 80 : index
    %c0_4 = arith.constant 0 : index
    %4 = vector.load %arg3[%c80, %c0_4] : memref<112x128xbf16, #tpu.memory_space<vmem>>, vector<4x4xbf16>
    %c96 = arith.constant 96 : index
    %c0_5 = arith.constant 0 : index
    %5 = vector.load %arg3[%c96, %c0_5] : memref<112x128xbf16, #tpu.memory_space<vmem>>, vector<4x1xbf16>
    %c0_6 = arith.constant 0 : index
    %c0_7 = arith.constant 0 : index
    %6 = vector.load %arg1[%c0_6, %c0_7] : memref<32x512xbf16, #tpu.memory_space<vmem>>, vector<32x512xbf16>
    %c0_8 = arith.constant 0 : index
    %c0_9 = arith.constant 0 : index
    %7 = vector.load %arg2[%c0_8, %c0_9] : memref<24x512xbf16, #tpu.memory_space<vmem>>, vector<24x512xbf16>
    %cst = arith.constant dense<0.000000e+00> : vector<24x512xf32>
    %8 = tpu.matmul %0, %7, %cst {dimension_numbers = #tpu.dot_dimension_numbers<[1], [0], [0], [1], [0, 0, 1, 1], [], []>} : vector<24x24xbf16>, vector<24x512xbf16>, vector<24x512xf32> -> vector<24x512xf32>
    %9 = vector.extract_strided_slice %8 {offsets = [0, 0], sizes = [8, 512], strides = [1, 1]} : vector<24x512xf32> to vector<8x512xf32>
    %10 = arith.mulf %9, %9 : vector<8x512xf32>
    %11 = vector.extract_strided_slice %8 {offsets = [8, 0], sizes = [8, 512], strides = [1, 1]} : vector<24x512xf32> to vector<8x512xf32>
    %12 = arith.mulf %11, %11 : vector<8x512xf32>
    %13 = arith.addf %10, %12 : vector<8x512xf32>
    %14 = vector.extract_strided_slice %8 {offsets = [16, 0], sizes = [8, 512], strides = [1, 1]} : vector<24x512xf32> to vector<8x512xf32>
    %15 = arith.mulf %14, %14 : vector<8x512xf32>
    %16 = arith.addf %13, %15 : vector<8x512xf32>
    %17 = math.sqrt %16 : vector<8x512xf32>
    %cst_10 = arith.constant dense<0.000000e+00> : vector<8x512xf32>
    %18 = tpu.matmul %2, %6, %cst_10 {dimension_numbers = #tpu.dot_dimension_numbers<[1], [0], [0], [1], [0, 0, 1, 1], [], []>} : vector<8x32xbf16>, vector<32x512xbf16>, vector<8x512xf32> -> vector<8x512xf32>
    %19 = tpu.concatenate %17, %18 in 0 : vector<8x512xf32>, vector<8x512xf32> -> vector<16x512xf32>
    %20 = arith.extf %3 : vector<4x16xbf16> to vector<4x16xf32>
    %cst_11 = arith.constant dense<0.000000e+00> : vector<4x512xf32>
    %21 = tpu.matmul %20, %19, %cst_11 {dimension_numbers = #tpu.dot_dimension_numbers<[1], [0], [0], [1], [0, 0, 1, 1], [], []>} : vector<4x16xf32>, vector<16x512xf32>, vector<4x512xf32> -> vector<4x512xf32>
    %22 = arith.extf %4 : vector<4x4xbf16> to vector<4x4xf32>
    %cst_12 = arith.constant dense<0.000000e+00> : vector<4x512xf32>
    %23 = tpu.matmul %22, %21, %cst_12 {dimension_numbers = #tpu.dot_dimension_numbers<[1], [0], [0], [1], [0, 0, 1, 1], [], []>} : vector<4x4xf32>, vector<4x512xf32>, vector<4x512xf32> -> vector<4x512xf32>
    %24 = arith.extf %5 : vector<4x1xbf16> to vector<4x1xf32>
    %25 = vector.broadcast %24 : vector<4x1xf32> to vector<4x512xf32>
    %26 = arith.addf %23, %25 : vector<4x512xf32>
    %27 = arith.negf %26 : vector<4x512xf32>
    %28 = math.exp %27 : vector<4x512xf32>
    %cst_13 = arith.constant 1.000000e+00 : f32
    %29 = vector.broadcast %cst_13 : f32 to vector<4x512xf32>
    %30 = arith.addf %29, %28 : vector<4x512xf32>
    %31 = arith.divf %29, %30 : vector<4x512xf32>
    %32 = tpu.concatenate %31, %31, %31 in 0 : vector<4x512xf32>, vector<4x512xf32>, vector<4x512xf32> -> vector<12x512xf32>
    %33 = arith.extf %1 : vector<12x24xbf16> to vector<12x24xf32>
    %cst_14 = arith.constant dense<0.000000e+00> : vector<12x512xf32>
    %34 = tpu.matmul %33, %8, %cst_14 {dimension_numbers = #tpu.dot_dimension_numbers<[1], [0], [0], [1], [0, 0, 1, 1], [], []>} : vector<12x24xf32>, vector<24x512xf32>, vector<12x512xf32> -> vector<12x512xf32>
    %35 = arith.mulf %32, %34 : vector<12x512xf32>
    %36 = tpu.concatenate %21, %35 in 0 : vector<4x512xf32>, vector<12x512xf32> -> vector<16x512xf32>
    %37 = arith.truncf %36 : vector<16x512xf32> to vector<16x512xbf16>
    %c0_15 = arith.constant 0 : index
    %c0_16 = arith.constant 0 : index
    %38 = vector.load %arg4[%c0_15, %c0_16] : memref<16x512xbf16, #tpu.memory_space<vmem>>, vector<16x512xbf16>
    tpu.vector_store %arg4[%c0_15, %c0_16], %37 {strides = array<i32>} : memref<16x512xbf16, #tpu.memory_space<vmem>>, vector<16x512xbf16>,
    return
  }
  func.func @transform_0(%arg0: i32) -> (i32, i32) {
    %c0_i32 = arith.constant 0 : i32
    %c0_i32_0 = arith.constant 0 : i32
    return %c0_i32, %arg0 : i32, i32
  }
  func.func @transform_1(%arg0: i32) -> (i32, i32) {
    %c0_i32 = arith.constant 0 : i32
    %c0_i32_0 = arith.constant 0 : i32
    return %c0_i32, %arg0 : i32, i32
  }
  func.func @transform_2(%arg0: i32) -> (i32, i32) {
    %c0_i32 = arith.constant 0 : i32
    %c0_i32_0 = arith.constant 0 : i32
    %c0_i32_1 = arith.constant 0 : i32
    return %c0_i32, %c0_i32_0 : i32, i32
  }
  func.func @transform_3(%arg0: i32) -> (i32, i32) {
    %c0_i32 = arith.constant 0 : i32
    %c0_i32_0 = arith.constant 0 : i32
    return %c0_i32, %arg0 : i32, i32
  }
}

</mosaic_0001>

<llo_original>
// kernel: tpu_custom_call.1
$region0: #{tpu_custom_call.1}
  #allocation0 [shape = 'u32[]', space=smem, size = 0x4, offset = 0x4, fixed_abs, tag = 'smem constant byte address 0x4 - core index']
  #allocation1 [shape = 'u32[144,128]{1,0:T(1,128)}', space=vmem, size = 0x12000, scoped, tag = 'internal scratch']
  %s0 = inlined_call_operand.hbm [shape: bf16[32,1024], index: 0, kind: input, shape index: {}]
  %s1 = inlined_call_operand.hbm [shape: bf16[24,1024], index: 1, kind: input, shape index: {}]
  %s2 = inlined_call_operand.hbm [shape: bf16[112,128], index: 2, kind: input, shape index: {}]
  %s3 = inlined_call_operand.hbm [shape: bf16[16,1024], index: 3, kind: output, shape index: {}]
  %s4 = sld [smem:[#allocation0]]
  $region57: #{tpu_custom_call.1} parent=0
    _
  %s6 = ssub.s32 1, %s4
  %s7 = scalar_select 0, %s6, %s4
  $region1: #{tpu_custom_call.1} parent=0
    #allocation2 [shape = 'u8[65536]{0}', space=vmem, size = 0x10000, scoped, tag = 'input window, operand 0']
    #allocation3 [shape = 's32[2]{0}', space=sflag, size = 0x8, scoped, tag = 'scoped memory for tpu_custom_call.1']
    #allocation4 [shape = 's32[2]{0}', space=sflag, size = 0x8, scoped, tag = 'scoped memory for tpu_custom_call.1']
    #allocation5 [shape = 'u8[49152]{0}', space=vmem, size = 0xc000, scoped, tag = 'input window, operand 1']
    #allocation6 [shape = 's32[2]{0}', space=sflag, size = 0x8, scoped, tag = 'scoped memory for tpu_custom_call.1']
    #allocation7 [shape = 'u8[28672]{0}', space=vmem, size = 0x7000, scoped, tag = 'input window, operand 2, single buffered']
    #allocation8 [shape = 'u8[32768]{0}', space=vmem, size = 0x8000, scoped, tag = 'output window, operand 0']
    %8 = vsyncpa [#allocation3], 0
    %s9 = scalar_lea.sflag [#allocation3], 1
    %10 = vsyncpa %s9, 0
    %11 = vsyncpa [#allocation6], 0
    %s12 = scalar_lea.sflag [#allocation6], 1
    %13 = vsyncpa %s12, 0
    %14 = vsyncpa [#allocation4], 0
    %s15 = scalar_lea.sflag [#allocation4], 1
    %16 = vsyncpa %s15, 0
    loop: start=0, step=1, limit=4
    $region2: #{tpu_custom_call.1} parent=1 // loop_pre_header
      _
    $region3: #{tpu_custom_call.1} parent=1 // loop_header
      %s18 = sphi 0, %s22
      %p19 = scmp.ge.s32.totalorder %s18, 4
      %s28 = sphi 0, %s30
      %s31 = sphi 0, %s28
      %s32 = sphi 0, %s31
      %s48 = sphi 0, %s32
      %s54 = sphi 0, %s56
      %s57 = sphi 0, %s54
      %s58 = sphi 0, %s57
      %s74 = sphi 0, %s58
      %s78 = sphi 0, %s78
      %s80 = sphi 0, %s78
      %s81 = sphi 0, %s80
      %s95 = sphi 0, %s81
      %s101 = sphi 0, %s103
      %s104 = sphi 0, %s101
      %s105 = sphi 0, %s104
      %s121 = sphi 0, %s105
    $region4: #{tpu_custom_call.1} parent=1 // loop_header_branch
      %21 = sbr.rel (%p19) target = $region8
    $region5: #{tpu_custom_call.1} parent=1 // loop_body
      %s23 = ssub.s32 %s18, 1
      %s24 = ssub.s32 %s18, 2
      %s25 = sadd.s32 %s18, 1
      %s26 = ssub.s32 %s18, %s25
      %p27 = scmp.eq.s32.totalorder %s26, 0
      %s29 = sadd.s32 %s28, 1
      %s30 = scalar_select %p27, %s28, %s29
      %p33 = pneg %p27
      %p34 = scmp.eq.s32.totalorder %s18, 1
      %p35 = por %p33, %p34
      %p36 = scmp.ne.s32.totalorder %s28, %s31
      %p37 = scmp.eq.s32.totalorder %s18, 0
      %p38 = por %p36, %p37
      %p39 = scmp.ne.s32.totalorder %s28, %s31
      %p40 = scmp.eq.s32.totalorder %s23, 1
      %p41 = por %p39, %p40
      %p42 = scmp.ne.s32.totalorder %s31, %s32
      %p43 = scmp.eq.s32.totalorder %s23, 0
      %p44 = por %p42, %p43
      %p45 = scmp.ne.s32.totalorder %s31, %s32
      %p46 = scmp.eq.s32.totalorder %s24, 1
      %p47 = por %p45, %p46
      %p49 = scmp.ne.s32.totalorder %s32, %s48
      %p50 = scmp.eq.s32.totalorder %s24, 0
      %p51 = por %p49, %p50
      %s52 = ssub.s32 %s18, %s25
      %p53 = scmp.eq.s32.totalorder %s52, 0
      %s55 = sadd.s32 %s54, 1
      %s56 = scalar_select %p53, %s54, %s55
      %p59 = pneg %p53
      %p60 = scmp.eq.s32.totalorder %s18, 1
      %p61 = por %p59, %p60
      %p62 = scmp.ne.s32.totalorder %s54, %s57
      %p63 = scmp.eq.s32.totalorder %s18, 0
      %p64 = por %p62, %p63
      %p65 = scmp.ne.s32.totalorder %s54, %s57
      %p66 = scmp.eq.s32.totalorder %s23, 1
      %p67 = por %p65, %p66
      %p68 = scmp.ne.s32.totalorder %s57, %s58
      %p69 = scmp.eq.s32.totalorder %s23, 0
      %p70 = por %p68, %p69
      %p71 = scmp.ne.s32.totalorder %s57, %s58
      %p72 = scmp.eq.s32.totalorder %s24, 1
      %p73 = por %p71, %p72
      %p75 = scmp.ne.s32.totalorder %s58, %s74
      %p76 = scmp.eq.s32.totalorder %s24, 0
      %p77 = por %p75, %p76
      %s79 = sadd.s32 %s78, 1
      %p82 = scmp.eq.s32.totalorder %s18, 1
      %p83 = scmp.ne.s32.totalorder %s78, %s80
      %p84 = scmp.eq.s32.totalorder %s18, 0
      %p85 = por %p83, %p84
      %p86 = scmp.ne.s32.totalorder %s78, %s80
      %p87 = scmp.eq.s32.totalorder %s23, 1
      %p88 = por %p86, %p87
      %p89 = scmp.ne.s32.totalorder %s80, %s81
      %p90 = scmp.eq.s32.totalorder %s23, 0
      %p91 = por %p89, %p90
      %p92 = scmp.ne.s32.totalorder %s80, %s81
      %p93 = scmp.eq.s32.totalorder %s24, 1
      %p94 = por %p92, %p93
      %p96 = scmp.ne.s32.totalorder %s81, %s95
      %p97 = scmp.eq.s32.totalorder %s24, 0
      %p98 = por %p96, %p97
      %s99 = ssub.s32 %s18, %s25
      %p100 = scmp.eq.s32.totalorder %s99, 0
      %s102 = sadd.s32 %s101, 1
      %s103 = scalar_select %p100, %s101, %s102
      %p106 = pneg %p100
      %p107 = scmp.eq.s32.totalorder %s18, 1
      %p108 = por %p106, %p107
      %p109 = scmp.ne.s32.totalorder %s101, %s104
      %p110 = scmp.eq.s32.totalorder %s18, 0
      %p111 = por %p109, %p110
      %p112 = scmp.ne.s32.totalorder %s101, %s104
      %p113 = scmp.eq.s32.totalorder %s23, 1
      %p114 = por %p112, %p113
      %p115 = scmp.ne.s32.totalorder %s104, %s105
      %p116 = scmp.eq.s32.totalorder %s23, 0
      %p117 = por %p115, %p116
      %p118 = scmp.ne.s32.totalorder %s104, %s105
      %p119 = scmp.eq.s32.totalorder %s24, 1
      %p120 = por %p118, %p119
      %p122 = scmp.ne.s32.totalorder %s105, %s121
      %p123 = scmp.eq.s32.totalorder %s24, 0
      %p124 = por %p122, %p123
      %p125 = scmp.le.s32.totalorder 1, %s18
      %p126 = scmp.lt.s32.totalorder %s18, 3
      %p127 = pnand %p125, %p126
      %p128 = pneg %p127
      // Predicated region
      $region9: #{tpu_custom_call.1} parent=5 // pred_check
        _
      $region10: #{tpu_custom_call.1} parent=5 // pred_check_branch
        %130 = sbr.rel (%p127) target = $region12
      $region11: #{tpu_custom_call.1} parent=5 // pred_region
        %s131 = ssub.s32 %s18, 1
        // Predicated region
        $region13: #{tpu_custom_call.1} parent=11 // pred_check
          %p132 = pneg %p91
        $region14: #{tpu_custom_call.1} parent=11 // pred_check_branch
          %134 = sbr.rel (%p132) target = $region16
        $region15: #{tpu_custom_call.1} parent=11 // pred_region
          %s136 = ssub.s32 896, 896
          %137 = vsyncadd [#allocation6], %s136
          %s138 = sshll.u32 [#allocation7], 4
          %s139 = int_to_ptr.vmem [resolvable:$true] %s138
          %144 = dma.hbm_to_vmem [thread:$0]  %s2, 896, %s139, [#allocation6], 64, 64, 4
        $region16: #{tpu_custom_call.1} parent=11 // pred_fallthru
          _
      $region12: #{tpu_custom_call.1} parent=5 // pred_fallthru
        _
      %p145 = scmp.lt.s32.totalorder %s18, 2
      // Predicated region
      $region17: #{tpu_custom_call.1} parent=5 // pred_check
        %p146 = pneg %p145
      $region18: #{tpu_custom_call.1} parent=5 // pred_check_branch
        %148 = sbr.rel (%p146) target = $region20
      $region19: #{tpu_custom_call.1} parent=5 // pred_region
        // Predicated region
        $region21: #{tpu_custom_call.1} parent=19 // pred_check
          %p149 = pneg %p38
        $region22: #{tpu_custom_call.1} parent=19 // pred_check_branch
          %151 = sbr.rel (%p149) target = $region24
        $region23: #{tpu_custom_call.1} parent=19 // pred_region
          %s152 = sand.u32 %s28, 1
          %s153 = scalar_lea.sflag [#allocation3], %s152
          %s154 = sand.u32 %s28, 1
          %s155 = smul.addr %s154, 64
          %s156 = scalar_lea.vmem [#allocation2], %s155
          %s157 = smul.u32 4, %s18
          %s159 = ssub.s32 1024, 1024
          %160 = vsyncadd %s153, %s159
          %s161 = smul.addr %s157, 64
          %s162 = scalar_lea.hbm %s0, %s161
          %s163 = sshll.u32 %s156, 4
          %s164 = int_to_ptr.vmem [resolvable:$true] %s163
          %169 = dma.hbm_to_vmem [thread:$0]  %s162, 1024, %s164, %s153, 512, 256, 16
        $region24: #{tpu_custom_call.1} parent=19 // pred_fallthru
          _
        // Predicated region
        $region25: #{tpu_custom_call.1} parent=19 // pred_check
          %p170 = pneg %p64
        $region26: #{tpu_custom_call.1} parent=19 // pred_check_branch
          %172 = sbr.rel (%p170) target = $region28
        $region27: #{tpu_custom_call.1} parent=19 // pred_region
          %s173 = sand.u32 %s18, 1
          %s174 = scalar_lea.sflag [#allocation6], %s173
          %s175 = sand.u32 %s54, 1
          %s176 = smul.addr %s175, 48
          %s177 = scalar_lea.vmem [#allocation5], %s176
          %s178 = smul.u32 4, %s18
          %s180 = ssub.s32 768, 768
          %181 = vsyncadd %s174, %s180
          %s182 = smul.addr %s178, 64
          %s183 = scalar_lea.hbm %s1, %s182
          %s184 = sshll.u32 %s177, 4
          %s185 = int_to_ptr.vmem [resolvable:$true] %s184
          %190 = dma.hbm_to_vmem [thread:$0]  %s183, 768, %s185, %s174, 512, 256, 16
        $region28: #{tpu_custom_call.1} parent=19 // pred_fallthru
          _
      $region20: #{tpu_custom_call.1} parent=5 // pred_fallthru
        _
      %p191 = scmp.le.s32.totalorder 1, %s18
      %p192 = scmp.lt.s32.totalorder %s18, 3
      %p193 = pnand %p191, %p192
      %p194 = pneg %p193
      // Predicated region
      $region29: #{tpu_custom_call.1} parent=5 // pred_check
        _
      $region30: #{tpu_custom_call.1} parent=5 // pred_check_branch
        %196 = sbr.rel (%p193) target = $region32
      $region31: #{tpu_custom_call.1} parent=5 // pred_region
        %s197 = ssub.s32 %s18, 1
        %s198 = sand.u32 %s31, 1
        %s199 = scalar_lea.sflag [#allocation3], %s198
        %s200 = sand.u32 %s31, 1
        %s201 = smul.addr %s200, 64
        %s202 = scalar_lea.vmem [#allocation2], %s201
        // Predicated region
        $region33: #{tpu_custom_call.1} parent=31 // pred_check
          %p203 = pneg %p44
        $region34: #{tpu_custom_call.1} parent=31 // pred_check_branch
          %205 = sbr.rel (%p203) target = $region36
        $region35: #{tpu_custom_call.1} parent=31 // pred_region
          %206 = dma.done %s199, 1024
        $region36: #{tpu_custom_call.1} parent=31 // pred_fallthru
          _
        %s207 = sand.u32 %s23, 1
        %s208 = scalar_lea.sflag [#allocation6], %s207
        %s209 = sand.u32 %s57, 1
        %s210 = smul.addr %s209, 48
        %s211 = scalar_lea.vmem [#allocation5], %s210
        // Predicated region
        $region37: #{tpu_custom_call.1} parent=31 // pred_check
          %p212 = pneg %p70
        $region38: #{tpu_custom_call.1} parent=31 // pred_check_branch
          %214 = sbr.rel (%p212) target = $region40
        $region39: #{tpu_custom_call.1} parent=31 // pred_region
          %215 = dma.done %s208, 768
        $region40: #{tpu_custom_call.1} parent=31 // pred_fallthru
          _
        // Predicated region
        $region41: #{tpu_custom_call.1} parent=31 // pred_check
          %p216 = pneg %p91
        $region42: #{tpu_custom_call.1} parent=31 // pred_check_branch
          %218 = sbr.rel (%p216) target = $region44
        $region43: #{tpu_custom_call.1} parent=31 // pred_region
          %219 = dma.done [#allocation6], 896
        $region44: #{tpu_custom_call.1} parent=31 // pred_fallthru
          _
        %s220 = sand.u32 %s31, 1
        %s221 = scalar_lea.sflag [#allocation3], %s220
        %s222 = sand.u32 %s31, 1
        %s223 = smul.addr %s222, 64
        %s224 = scalar_lea.vmem [#allocation2], %s223
        %p225 = pneg %p44
        %p226 = pneg %p41
        %s227 = sand.u32 %s23, 1
        %s228 = scalar_lea.sflag [#allocation6], %s227
        %s229 = sand.u32 %s57, 1
        %s230 = smul.addr %s229, 48
        %s231 = scalar_lea.vmem [#allocation5], %s230
        %p232 = pneg %p70
        %p233 = pneg %p67
        %p234 = pneg %p91
        %p235 = pneg %p88
        %p236 = pneg %p117
        %p237 = pneg %p114
        %s238 = sand.u32 %s104, 1
        %s239 = scalar_lea.sflag [#allocation4], %s238
        %s240 = sand.u32 %s104, 1
        %s241 = smul.addr %s240, 32
        %s242 = scalar_lea.vmem [#allocation8], %s241
        %s243 = smul.u32 4, %s23
        %s244 = smul.u32 4, %s23
        %s245 = smul.u32 4, %s23
        %v247 = vld [vmem:[#allocation7] sm:$0xf]
        %v248 = vld [vmem:[#allocation7 + $0x4] sm:$0xf]
        %v249 = vld [vmem:[#allocation7 + $0x8] sm:$0xf]
        %v250 = vld [vmem:[#allocation7 + $0x10] sm:$0xf]
        %v251 = vld [vmem:[#allocation7 + $0x14] sm:$0x3]
        %v252 = vld [vmem:[#allocation7 + $0x18] sm:$0xf]
        %v253 = vld [vmem:[#allocation7 + $0x20] sm:$0x3]
        %v254 = vld [vmem:[#allocation7 + $0x28] sm:$0x3]
        %v255 = vld [vmem:[#allocation7 + $0x30] sm:$0x3]
        %v256 = vld [vmem:[%s202] sm:$0xff]
        %v257 = vld [vmem:[%s202 + $0x8] sm:$0xff]
        %v258 = vld [vmem:[%s202 + $0x10] sm:$0xff]
        %v259 = vld [vmem:[%s202 + $0x18] sm:$0xff]
        %v260 = vld [vmem:[%s202 + $0x20] sm:$0xff]
        %v261 = vld [vmem:[%s202 + $0x28] sm:$0xff]
        %v262 = vld [vmem:[%s202 + $0x30] sm:$0xff]
        %v263 = vld [vmem:[%s202 + $0x38] sm:$0xff]
        %v264 = vld [vmem:[%s211] sm:$0xff]
        %v265 = vld [vmem:[%s211 + $0x8] sm:$0xff]
        %v266 = vld [vmem:[%s211 + $0x10] sm:$0xff]
        %v267 = vld [vmem:[%s211 + $0x18] sm:$0xff]
        %v268 = vld [vmem:[%s211 + $0x20] sm:$0xff]
        %v269 = vld [vmem:[%s211 + $0x28] sm:$0xff]
        %v273 = vunpack.c.l.b16 %v247
        %v274 = vunpack.c.l.b16 %v248
        %v275 = vunpack.c.l.b16 %v249
        %v276 = vpack.c.b16 %v274, %v273
        %v277 = vpack.c.b16 %v275, %v275
        %v284 = vunpack.c.l.b16 %v264
        %v285 = vunpack.c.h.b16 %v264
        %v286 = vunpack.c.l.b16 %v265
        %v287 = vunpack.c.h.b16 %v265
        %v288 = vunpack.c.l.b16 %v266
        %v289 = vunpack.c.h.b16 %v266
        %v290 = vunpack.c.l.b16 %v267
        %v291 = vunpack.c.h.b16 %v267
        %v292 = vunpack.c.l.b16 %v268
        %v293 = vunpack.c.h.b16 %v268
        %v294 = vunpack.c.l.b16 %v269
        %v295 = vunpack.c.h.b16 %v269
        %v296 = vpack.c.b16 %v288, %v284
        %v297 = vpack.c.b16 %v289, %v285
        %v298 = vpack.c.b16 %v290, %v286
        %v299 = vpack.c.b16 %v291, %v287
        %v300 = vpack.c.b16 %v292, %v292
        %v301 = vpack.c.b16 %v293, %v293
        %v302 = vpack.c.b16 %v294, %v294
        %v303 = vpack.c.b16 %v295, %v295
        %vm308 = vcmask 195584
        %v310 = vsel %vm308, %v276, 0
        %v313 = vsel %vm308, %v277, 0
        %vm315 = vcmask 1043456
        %v317 = vsel %vm315, %v300, 0
        %v320 = vsel %vm315, %v301, 0
        %v323 = vsel %vm315, %v302, 0
        %v326 = vsel %vm315, %v303, 0
        %328 = vmatprep.subr.bf16.mxu0 0
        %329 = vmatpush1.bf16.msra.mxu0 0
        %330 = vmatprep.subr.bf16.mxu0 0
        %331 = vmatpush1.bf16.msra.mxu0 0
        %332 = vmatprep.subr.bf16.mxu0 0
        %333 = vmatpush1.bf16.msra.mxu0 0
        %334 = vmatprep.subr.bf16.mxu0 0
        %335 = vmatpush1.bf16.msra.mxu0 0
        %336 = vmatprep.subr.bf16.mxu0 0
        %337 = vmatpush1.bf16.msra.mxu0 0
        %338 = vmatprep.subr.bf16.mxu0 0
        %339 = vmatpush1.bf16.msra.mxu0 0
        %340 = vmatprep.subr.bf16.mxu0 %v320
        %341 = vmatpush1.bf16.msra.mxu0 %v317
        %342 = vmatprep.subr.bf16.mxu0 %v297
        %343 = vmatpush1.bf16.msra.mxu0 %v296
        %344 = vmatprep.subr.bf16.mxu0 0
        %345 = vmatpush2.bf16.msra.mxu0 0
        %346 = vmatprep.subr.bf16.mxu0 0
        %347 = vmatpush2.bf16.msra.mxu0 0
        %348 = vmatprep.subr.bf16.mxu0 0
        %349 = vmatpush2.bf16.msra.mxu0 0
        %350 = vmatprep.subr.bf16.mxu0 0
        %351 = vmatpush2.bf16.msra.mxu0 0
        %352 = vmatprep.subr.bf16.mxu0 0
        %353 = vmatpush2.bf16.msra.mxu0 0
        %354 = vmatprep.subr.bf16.mxu0 0
        %355 = vmatpush2.bf16.msra.mxu0 0
        %356 = vmatprep.subr.bf16.mxu0 0
        %357 = vmatpush2.bf16.msra.mxu0 0
        %358 = vmatprep.subr.bf16.mxu0 0
        %359 = vmatpush2.bf16.msra.mxu0 0
        %360 = vmatprep.mubr.bf16.mxu0 0
        %361 = vmatmul.mubr.bf16.gmra.mxu0 %v310
        %v362 = vpop.f32.mrf.mxu0
        %v363 = vadd.f32 0.0, %v362
        %v364 = vpop.f32.mrf.mxu0
        %v365 = vadd.f32 0.0, %v364
        %v366 = vpop.f32.mrf.mxu0
        %v367 = vadd.f32 0.0, %v366
        %v368 = vpop.f32.mrf.mxu0
        %v369 = vadd.f32 0.0, %v368
        %370 = vmatprep.mubr.bf16.mxu0 0
        %371 = vmatmul.mubr.bf16.gmra.mxu0 %v313
        %v372 = vpop.f32.mrf.mxu0
        %v373 = vadd.f32 0.0, %v372
        %v374 = vpop.f32.mrf.mxu0
        %v375 = vadd.f32 0.0, %v374
        %v376 = vpop.f32.mrf.mxu0
        %v377 = vpop.f32.mrf.mxu0
        %378 = vdwg.mxu0
        %379 = vmatprep.subr.bf16.mxu0 0
        %380 = vmatpush1.bf16.msra.mxu0 0
        %381 = vmatprep.subr.bf16.mxu0 0
        %382 = vmatpush1.bf16.msra.mxu0 0
        %383 = vmatprep.subr.bf16.mxu0 0
        %384 = vmatpush1.bf16.msra.mxu0 0
        %385 = vmatprep.subr.bf16.mxu0 0
        %386 = vmatpush1.bf16.msra.mxu0 0
        %387 = vmatprep.subr.bf16.mxu0 0
        %388 = vmatpush1.bf16.msra.mxu0 0
        %389 = vmatprep.subr.bf16.mxu0 0
        %390 = vmatpush1.bf16.msra.mxu0 0
        %391 = vmatprep.subr.bf16.mxu0 %v326
        %392 = vmatpush1.bf16.msra.mxu0 %v323
        %393 = vmatprep.subr.bf16.mxu0 %v299
        %394 = vmatpush1.bf16.msra.mxu0 %v298
        %395 = vmatprep.subr.bf16.mxu0 0
        %396 = vmatpush2.bf16.msra.mxu0 0
        %397 = vmatprep.subr.bf16.mxu0 0
        %398 = vmatpush2.bf16.msra.mxu0 0
        %399 = vmatprep.subr.bf16.mxu0 0
        %400 = vmatpush2.bf16.msra.mxu0 0
        %401 = vmatprep.subr.bf16.mxu0 0
        %402 = vmatpush2.bf16.msra.mxu0 0
        %403 = vmatprep.subr.bf16.mxu0 0
        %404 = vmatpush2.bf16.msra.mxu0 0
        %405 = vmatprep.subr.bf16.mxu0 0
        %406 = vmatpush2.bf16.msra.mxu0 0
        %407 = vmatprep.subr.bf16.mxu0 0
        %408 = vmatpush2.bf16.msra.mxu0 0
        %409 = vmatprep.subr.bf16.mxu0 0
        %410 = vmatpush2.bf16.msra.mxu0 0
        %411 = vmatprep.mubr.bf16.mxu0 0
        %412 = vmatmul.mubr.bf16.gmra.mxu0 %v310
        %v413 = vpop.f32.mrf.mxu0
        %v414 = vadd.f32 0.0, %v413
        %v415 = vpop.f32.mrf.mxu0
        %v416 = vadd.f32 0.0, %v415
        %v417 = vpop.f32.mrf.mxu0
        %v418 = vadd.f32 0.0, %v417
        %v419 = vpop.f32.mrf.mxu0
        %v420 = vadd.f32 0.0, %v419
        %421 = vmatprep.mubr.bf16.mxu0 0
        %422 = vmatmul.mubr.bf16.gmra.mxu0 %v313
        %v423 = vpop.f32.mrf.mxu0
        %v424 = vadd.f32 0.0, %v423
        %v425 = vpop.f32.mrf.mxu0
        %v426 = vadd.f32 0.0, %v425
        %v427 = vpop.f32.mrf.mxu0
        %v428 = vpop.f32.mrf.mxu0
        %429 = vdwg.mxu0
        %v430 = vmul.f32 %v363, %v363
        %v431 = vmul.f32 %v365, %v365
        %v432 = vmul.f32 %v414, %v414
        %v433 = vmul.f32 %v416, %v416
        %v434 = vmul.f32 %v367, %v367
        %v435 = vmul.f32 %v369, %v369
        %v436 = vmul.f32 %v418, %v418
        %v437 = vmul.f32 %v420, %v420
        %v438 = vadd.f32 %v430, %v434
        %v439 = vadd.f32 %v431, %v435
        %v440 = vadd.f32 %v432, %v436
        %v441 = vadd.f32 %v433, %v437
        %v442 = vmul.f32 %v373, %v373
        %v443 = vmul.f32 %v375, %v375
        %v444 = vmul.f32 %v424, %v424
        %v445 = vmul.f32 %v426, %v426
        %v446 = vadd.f32 %v438, %v442
        %v447 = vadd.f32 %v439, %v443
        %v448 = vadd.f32 %v440, %v444
        %v449 = vadd.f32 %v441, %v445
        %v450 = vrsqrt.pop %v446
        %v451 = vmul.f32 %v446, %v450
        %vm452 = vcmp.eq.f32.partialorder %v446, inf
        %v453 = vsel %vm452, %v446, %v451
        %vm454 = vcmp.eq.f32.partialorder %v446, 0.0
        %v455 = vand.u32 %v446, 2147483648
        %v456 = vsel %vm454, %v455, %v453
        %v457 = vrsqrt.pop %v447
        %v458 = vmul.f32 %v447, %v457
        %vm459 = vcmp.eq.f32.partialorder %v447, inf
        %v460 = vsel %vm459, %v447, %v458
        %vm461 = vcmp.eq.f32.partialorder %v447, 0.0
        %v462 = vand.u32 %v447, 2147483648
        %v463 = vsel %vm461, %v462, %v460
        %v464 = vrsqrt.pop %v448
        %v465 = vmul.f32 %v448, %v464
        %vm466 = vcmp.eq.f32.partialorder %v448, inf
        %v467 = vsel %vm466, %v448, %v465
        %vm468 = vcmp.eq.f32.partialorder %v448, 0.0
        %v469 = vand.u32 %v448, 2147483648
        %v470 = vsel %vm468, %v469, %v467
        %v471 = vrsqrt.pop %v449
        %v472 = vmul.f32 %v449, %v471
        %vm473 = vcmp.eq.f32.partialorder %v449, inf
        %v474 = vsel %vm473, %v449, %v472
        %vm475 = vcmp.eq.f32.partialorder %v449, 0.0
        %v476 = vand.u32 %v449, 2147483648
        %v477 = vsel %vm475, %v476, %v474
        %v486 = vunpack.c.l.b16 %v256
        %v487 = vunpack.c.h.b16 %v256
        %v488 = vunpack.c.l.b16 %v257
        %v489 = vunpack.c.h.b16 %v257
        %v490 = vunpack.c.l.b16 %v258
        %v491 = vunpack.c.h.b16 %v258
        %v492 = vunpack.c.l.b16 %v259
        %v493 = vunpack.c.h.b16 %v259
        %v494 = vunpack.c.l.b16 %v260
        %v495 = vunpack.c.h.b16 %v260
        %v496 = vunpack.c.l.b16 %v261
        %v497 = vunpack.c.h.b16 %v261
        %v498 = vunpack.c.l.b16 %v262
        %v499 = vunpack.c.h.b16 %v262
        %v500 = vunpack.c.l.b16 %v263
        %v501 = vunpack.c.h.b16 %v263
        %v502 = vpack.c.b16 %v490, %v486
        %v503 = vpack.c.b16 %v491, %v487
        %v504 = vpack.c.b16 %v492, %v488
        %v505 = vpack.c.b16 %v493, %v489
        %v506 = vpack.c.b16 %v498, %v494
        %v507 = vpack.c.b16 %v499, %v495
        %v508 = vpack.c.b16 %v500, %v496
        %v509 = vpack.c.b16 %v501, %v497
        %vm518 = vcmask 261120
        %v520 = vsel %vm518, %v252, 0
        %522 = vmatprep.subr.bf16.mxu0 0
        %523 = vmatpush1.bf16.msra.mxu0 0
        %524 = vmatprep.subr.bf16.mxu0 0
        %525 = vmatpush1.bf16.msra.mxu0 0
        %526 = vmatprep.subr.bf16.mxu0 0
        %527 = vmatpush1.bf16.msra.mxu0 0
        %528 = vmatprep.subr.bf16.mxu0 0
        %529 = vmatpush1.bf16.msra.mxu0 0
        %530 = vmatprep.subr.bf16.mxu0 0
        %531 = vmatpush1.bf16.msra.mxu0 0
        %532 = vmatprep.subr.bf16.mxu0 0
        %533 = vmatpush1.bf16.msra.mxu0 0
        %534 = vmatprep.subr.bf16.mxu0 %v507
        %535 = vmatpush1.bf16.msra.mxu0 %v506
        %536 = vmatprep.subr.bf16.mxu0 %v503
        %537 = vmatpush1.bf16.msra.mxu0 %v502
        %538 = vmatprep.subr.bf16.mxu0 0
        %539 = vmatpush2.bf16.msra.mxu0 0
        %540 = vmatprep.subr.bf16.mxu0 0
        %541 = vmatpush2.bf16.msra.mxu0 0
        %542 = vmatprep.subr.bf16.mxu0 0
        %543 = vmatpush2.bf16.msra.mxu0 0
        %544 = vmatprep.subr.bf16.mxu0 0
        %545 = vmatpush2.bf16.msra.mxu0 0
        %546 = vmatprep.subr.bf16.mxu0 0
        %547 = vmatpush2.bf16.msra.mxu0 0
        %548 = vmatprep.subr.bf16.mxu0 0
        %549 = vmatpush2.bf16.msra.mxu0 0
        %550 = vmatprep.subr.bf16.mxu0 0
        %551 = vmatpush2.bf16.msra.mxu0 0
        %552 = vmatprep.subr.bf16.mxu0 0
        %553 = vmatpush2.bf16.msra.mxu0 0
        %554 = vmatprep.mubr.bf16.mxu0 0
        %555 = vmatmul.mubr.bf16.gmra.mxu0 %v520
        %v556 = vpop.f32.mrf.mxu0
        %v557 = vadd.f32 0.0, %v556
        %v558 = vpop.f32.mrf.mxu0
        %v559 = vadd.f32 0.0, %v558
        %v560 = vpop.f32.mrf.mxu0
        %v561 = vpop.f32.mrf.mxu0
        %562 = vdwg.mxu0
        %563 = vmatprep.subr.bf16.mxu0 0
        %564 = vmatpush1.bf16.msra.mxu0 0
        %565 = vmatprep.subr.bf16.mxu0 0
        %566 = vmatpush1.bf16.msra.mxu0 0
        %567 = vmatprep.subr.bf16.mxu0 0
        %568 = vmatpush1.bf16.msra.mxu0 0
        %569 = vmatprep.subr.bf16.mxu0 0
        %570 = vmatpush1.bf16.msra.mxu0 0
        %571 = vmatprep.subr.bf16.mxu0 0
        %572 = vmatpush1.bf16.msra.mxu0 0
        %573 = vmatprep.subr.bf16.mxu0 0
        %574 = vmatpush1.bf16.msra.mxu0 0
        %575 = vmatprep.subr.bf16.mxu0 %v509
        %576 = vmatpush1.bf16.msra.mxu0 %v508
        %577 = vmatprep.subr.bf16.mxu0 %v505
        %578 = vmatpush1.bf16.msra.mxu0 %v504
        %579 = vmatprep.subr.bf16.mxu0 0
        %580 = vmatpush2.bf16.msra.mxu0 0
        %581 = vmatprep.subr.bf16.mxu0 0
        %582 = vmatpush2.bf16.msra.mxu0 0
        %583 = vmatprep.subr.bf16.mxu0 0
        %584 = vmatpush2.bf16.msra.mxu0 0
        %585 = vmatprep.subr.bf16.mxu0 0
        %586 = vmatpush2.bf16.msra.mxu0 0
        %587 = vmatprep.subr.bf16.mxu0 0
        %588 = vmatpush2.bf16.msra.mxu0 0
        %589 = vmatprep.subr.bf16.mxu0 0
        %590 = vmatpush2.bf16.msra.mxu0 0
        %591 = vmatprep.subr.bf16.mxu0 0
        %592 = vmatpush2.bf16.msra.mxu0 0
        %593 = vmatprep.subr.bf16.mxu0 0
        %594 = vmatpush2.bf16.msra.mxu0 0
        %595 = vmatprep.mubr.bf16.mxu0 0
        %596 = vmatmul.mubr.bf16.gmra.mxu0 %v520
        %v597 = vpop.f32.mrf.mxu0
        %v598 = vadd.f32 0.0, %v597
        %v599 = vpop.f32.mrf.mxu0
        %v600 = vadd.f32 0.0, %v599
        %v601 = vpop.f32.mrf.mxu0
        %v602 = vpop.f32.mrf.mxu0
        %603 = vdwg.mxu0
        %v604 = vunpack.c.l.bf16 %v253
        %vm605 = vcmask 130048
        %v607 = vsel %vm605, %v604, 0
        %609 = vmatprep.subr.mxu0 0.0
        %610 = vmatpush1.msra.mxu0 0.0
        %611 = vmatprep.subr.mxu0 0.0
        %612 = vmatpush1.msra.mxu0 0.0
        %613 = vmatprep.subr.mxu0 0.0
        %614 = vmatpush1.msra.mxu0 0.0
        %615 = vmatprep.subr.mxu0 0.0
        %616 = vmatpush1.msra.mxu0 0.0
        %617 = vmatprep.subr.mxu0 0.0
        %618 = vmatpush1.msra.mxu0 0.0
        %619 = vmatprep.subr.mxu0 0.0
        %620 = vmatpush1.msra.mxu0 0.0
        %621 = vmatprep.subr.mxu0 0.0
        %622 = vmatpush1.msra.mxu0 0.0
        %623 = vmatprep.subr.mxu0 0.0
        %624 = vmatpush1.msra.mxu0 0.0
        %625 = vmatprep.subr.mxu0 0.0
        %626 = vmatpush1.msra.mxu0 0.0
        %627 = vmatprep.subr.mxu0 0.0
        %628 = vmatpush1.msra.mxu0 0.0
        %629 = vmatprep.subr.mxu0 0.0
        %630 = vmatpush1.msra.mxu0 0.0
        %631 = vmatprep.subr.mxu0 0.0
        %632 = vmatpush1.msra.mxu0 0.0
        %633 = vmatprep.subr.mxu0 0.0
        %634 = vmatpush1.msra.mxu0 0.0
        %635 = vmatprep.subr.mxu0 0.0
        %636 = vmatpush1.msra.mxu0 0.0
        %637 = vmatprep.subr.mxu0 %v559
        %638 = vmatpush1.msra.mxu0 %v557
        %639 = vmatprep.subr.mxu0 %v463
        %640 = vmatpush1.msra.mxu0 %v456
        %641 = vmatprep.subr.mxu0 0.0
        %642 = vmatpush2.msra.mxu0 0.0
        %643 = vmatprep.subr.mxu0 0.0
        %644 = vmatpush2.msra.mxu0 0.0
        %645 = vmatprep.subr.mxu0 0.0
        %646 = vmatpush2.msra.mxu0 0.0
        %647 = vmatprep.subr.mxu0 0.0
        %648 = vmatpush2.msra.mxu0 0.0
        %649 = vmatprep.subr.mxu0 0.0
        %650 = vmatpush2.msra.mxu0 0.0
        %651 = vmatprep.subr.mxu0 0.0
        %652 = vmatpush2.msra.mxu0 0.0
        %653 = vmatprep.subr.mxu0 0.0
        %654 = vmatpush2.msra.mxu0 0.0
        %655 = vmatprep.subr.mxu0 0.0
        %656 = vmatpush2.msra.mxu0 0.0
        %657 = vmatprep.subr.mxu0 0.0
        %658 = vmatpush2.msra.mxu0 0.0
        %659 = vmatprep.subr.mxu0 0.0
        %660 = vmatpush2.msra.mxu0 0.0
        %661 = vmatprep.subr.mxu0 0.0
        %662 = vmatpush2.msra.mxu0 0.0
        %663 = vmatprep.subr.mxu0 0.0
        %664 = vmatpush2.msra.mxu0 0.0
        %665 = vmatprep.subr.mxu0 0.0
        %666 = vmatpush2.msra.mxu0 0.0
        %667 = vmatprep.subr.mxu0 0.0
        %668 = vmatpush2.msra.mxu0 0.0
        %669 = vmatprep.subr.mxu0 0.0
        %670 = vmatpush2.msra.mxu0 0.0
        %671 = vmatprep.subr.mxu0 0.0
        %672 = vmatpush2.msra.mxu0 0.0
        %673 = vmatprep.mubr.f32.mxu0 0.0
        %674 = vmatmul.mubr.f32.gmra.mxu0 %v607
        %v675 = vpop.f32.mrf.mxu0
        %v676 = vadd.f32 0.0, %v675
        %v677 = vpop.f32.mrf.mxu0
        %v678 = vadd.f32 0.0, %v677
        %679 = vdwg.mxu0
        %680 = vmatprep.subr.mxu0 0.0
        %681 = vmatpush1.msra.mxu0 0.0
        %682 = vmatprep.subr.mxu0 0.0
        %683 = vmatpush1.msra.mxu0 0.0
        %684 = vmatprep.subr.mxu0 0.0
        %685 = vmatpush1.msra.mxu0 0.0
        %686 = vmatprep.subr.mxu0 0.0
        %687 = vmatpush1.msra.mxu0 0.0
        %688 = vmatprep.subr.mxu0 0.0
        %689 = vmatpush1.msra.mxu0 0.0
        %690 = vmatprep.subr.mxu0 0.0
        %691 = vmatpush1.msra.mxu0 0.0
        %692 = vmatprep.subr.mxu0 0.0
        %693 = vmatpush1.msra.mxu0 0.0
        %694 = vmatprep.subr.mxu0 0.0
        %695 = vmatpush1.msra.mxu0 0.0
        %696 = vmatprep.subr.mxu0 0.0
        %697 = vmatpush1.msra.mxu0 0.0
        %698 = vmatprep.subr.mxu0 0.0
        %699 = vmatpush1.msra.mxu0 0.0
        %700 = vmatprep.subr.mxu0 0.0
        %701 = vmatpush1.msra.mxu0 0.0
        %702 = vmatprep.subr.mxu0 0.0
        %703 = vmatpush1.msra.mxu0 0.0
        %704 = vmatprep.subr.mxu0 0.0
        %705 = vmatpush1.msra.mxu0 0.0
        %706 = vmatprep.subr.mxu0 0.0
        %707 = vmatpush1.msra.mxu0 0.0
        %708 = vmatprep.subr.mxu0 %v600
        %709 = vmatpush1.msra.mxu0 %v598
        %710 = vmatprep.subr.mxu0 %v477
        %711 = vmatpush1.msra.mxu0 %v470
        %712 = vmatprep.subr.mxu0 0.0
        %713 = vmatpush2.msra.mxu0 0.0
        %714 = vmatprep.subr.mxu0 0.0
        %715 = vmatpush2.msra.mxu0 0.0
        %716 = vmatprep.subr.mxu0 0.0
        %717 = vmatpush2.msra.mxu0 0.0
        %718 = vmatprep.subr.mxu0 0.0
        %719 = vmatpush2.msra.mxu0 0.0
        %720 = vmatprep.subr.mxu0 0.0
        %721 = vmatpush2.msra.mxu0 0.0
        %722 = vmatprep.subr.mxu0 0.0
        %723 = vmatpush2.msra.mxu0 0.0
        %724 = vmatprep.subr.mxu0 0.0
        %725 = vmatpush2.msra.mxu0 0.0
        %726 = vmatprep.subr.mxu0 0.0
        %727 = vmatpush2.msra.mxu0 0.0
        %728 = vmatprep.subr.mxu0 0.0
        %729 = vmatpush2.msra.mxu0 0.0
        %730 = vmatprep.subr.mxu0 0.0
        %731 = vmatpush2.msra.mxu0 0.0
        %732 = vmatprep.subr.mxu0 0.0
        %733 = vmatpush2.msra.mxu0 0.0
        %734 = vmatprep.subr.mxu0 0.0
        %735 = vmatpush2.msra.mxu0 0.0
        %736 = vmatprep.subr.mxu0 0.0
        %737 = vmatpush2.msra.mxu0 0.0
        %738 = vmatprep.subr.mxu0 0.0
        %739 = vmatpush2.msra.mxu0 0.0
        %740 = vmatprep.subr.mxu0 0.0
        %741 = vmatpush2.msra.mxu0 0.0
        %742 = vmatprep.subr.mxu0 0.0
        %743 = vmatpush2.msra.mxu0 0.0
        %744 = vmatprep.mubr.f32.mxu0 0.0
        %745 = vmatmul.mubr.f32.gmra.mxu0 %v607
        %v746 = vpop.f32.mrf.mxu0
        %v747 = vadd.f32 0.0, %v746
        %v748 = vpop.f32.mrf.mxu0
        %v749 = vadd.f32 0.0, %v748
        %750 = vdwg.mxu0
        %v751 = vunpack.c.l.bf16 %v254
        %v752 = vunpack.c.l.bf16 %v255
        %754 = vset.pattern.permute.xlu0 0
        %755 = vperm.xlu0 %754, %v752
        %v756 = vpop.permute.xlu0 %755
        %vm758 = vcmask 31744
        %v760 = vsel %vm758, %v751, 0
        %v763 = vsel %vm315, %v676, 0
        %v766 = vsel %vm315, %v678, 0
        %v769 = vsel %vm315, %v747, 0
        %v772 = vsel %vm315, %v749, 0
        %774 = vmatprep.subr.mxu0 0.0
        %775 = vmatpush1.msra.mxu0 0.0
        %776 = vmatprep.subr.mxu0 0.0
        %777 = vmatpush1.msra.mxu0 0.0
        %778 = vmatprep.subr.mxu0 0.0
        %779 = vmatpush1.msra.mxu0 0.0
        %780 = vmatprep.subr.mxu0 0.0
        %781 = vmatpush1.msra.mxu0 0.0
        %782 = vmatprep.subr.mxu0 0.0
        %783 = vmatpush1.msra.mxu0 0.0
        %784 = vmatprep.subr.mxu0 0.0
        %785 = vmatpush1.msra.mxu0 0.0
        %786 = vmatprep.subr.mxu0 0.0
        %787 = vmatpush1.msra.mxu0 0.0
        %788 = vmatprep.subr.mxu0 0.0
        %789 = vmatpush1.msra.mxu0 0.0
        %790 = vmatprep.subr.mxu0 0.0
        %791 = vmatpush1.msra.mxu0 0.0
        %792 = vmatprep.subr.mxu0 0.0
        %793 = vmatpush1.msra.mxu0 0.0
        %794 = vmatprep.subr.mxu0 0.0
        %795 = vmatpush1.msra.mxu0 0.0
        %796 = vmatprep.subr.mxu0 0.0
        %797 = vmatpush1.msra.mxu0 0.0
        %798 = vmatprep.subr.mxu0 0.0
        %799 = vmatpush1.msra.mxu0 0.0
        %800 = vmatprep.subr.mxu0 0.0
        %801 = vmatpush1.msra.mxu0 0.0
        %802 = vmatprep.subr.mxu0 0.0
        %803 = vmatpush1.msra.mxu0 0.0
        %804 = vmatprep.subr.mxu0 %v766
        %805 = vmatpush1.msra.mxu0 %v763
        %806 = vmatprep.subr.mxu0 0.0
        %807 = vmatpush2.msra.mxu0 0.0
        %808 = vmatprep.subr.mxu0 0.0
        %809 = vmatpush2.msra.mxu0 0.0
        %810 = vmatprep.subr.mxu0 0.0
        %811 = vmatpush2.msra.mxu0 0.0
        %812 = vmatprep.subr.mxu0 0.0
        %813 = vmatpush2.msra.mxu0 0.0
        %814 = vmatprep.subr.mxu0 0.0
        %815 = vmatpush2.msra.mxu0 0.0
        %816 = vmatprep.subr.mxu0 0.0
        %817 = vmatpush2.msra.mxu0 0.0
        %818 = vmatprep.subr.mxu0 0.0
        %819 = vmatpush2.msra.mxu0 0.0
        %820 = vmatprep.subr.mxu0 0.0
        %821 = vmatpush2.msra.mxu0 0.0
        %822 = vmatprep.subr.mxu0 0.0
        %823 = vmatpush2.msra.mxu0 0.0
        %824 = vmatprep.subr.mxu0 0.0
        %825 = vmatpush2.msra.mxu0 0.0
        %826 = vmatprep.subr.mxu0 0.0
        %827 = vmatpush2.msra.mxu0 0.0
        %828 = vmatprep.subr.mxu0 0.0
        %829 = vmatpush2.msra.mxu0 0.0
        %830 = vmatprep.subr.mxu0 0.0
        %831 = vmatpush2.msra.mxu0 0.0
        %832 = vmatprep.subr.mxu0 0.0
        %833 = vmatpush2.msra.mxu0 0.0
        %834 = vmatprep.subr.mxu0 0.0
        %835 = vmatpush2.msra.mxu0 0.0
        %836 = vmatprep.subr.mxu0 0.0
        %837 = vmatpush2.msra.mxu0 0.0
        %838 = vmatprep.mubr.f32.mxu0 0.0
        %839 = vmatmul.mubr.f32.gmra.mxu0 %v760
        %v840 = vpop.f32.mrf.mxu0
        %v841 = vadd.f32 %v756, %v840
        %v842 = vpop.f32.mrf.mxu0
        %v843 = vadd.f32 %v756, %v842
        %844 = vdwg.mxu0
        %845 = vmatprep.subr.mxu0 0.0
        %846 = vmatpush1.msra.mxu0 0.0
        %847 = vmatprep.subr.mxu0 0.0
        %848 = vmatpush1.msra.mxu0 0.0
        %849 = vmatprep.subr.mxu0 0.0
        %850 = vmatpush1.msra.mxu0 0.0
        %851 = vmatprep.subr.mxu0 0.0
        %852 = vmatpush1.msra.mxu0 0.0
        %853 = vmatprep.subr.mxu0 0.0
        %854 = vmatpush1.msra.mxu0 0.0
        %855 = vmatprep.subr.mxu0 0.0
        %856 = vmatpush1.msra.mxu0 0.0
        %857 = vmatprep.subr.mxu0 0.0
        %858 = vmatpush1.msra.mxu0 0.0
        %859 = vmatprep.subr.mxu0 0.0
        %860 = vmatpush1.msra.mxu0 0.0
        %861 = vmatprep.subr.mxu0 0.0
        %862 = vmatpush1.msra.mxu0 0.0
        %863 = vmatprep.subr.mxu0 0.0
        %864 = vmatpush1.msra.mxu0 0.0
        %865 = vmatprep.subr.mxu0 0.0
        %866 = vmatpush1.msra.mxu0 0.0
        %867 = vmatprep.subr.mxu0 0.0
        %868 = vmatpush1.msra.mxu0 0.0
        %869 = vmatprep.subr.mxu0 0.0
        %870 = vmatpush1.msra.mxu0 0.0
        %871 = vmatprep.subr.mxu0 0.0
        %872 = vmatpush1.msra.mxu0 0.0
        %873 = vmatprep.subr.mxu0 0.0
        %874 = vmatpush1.msra.mxu0 0.0
        %875 = vmatprep.subr.mxu0 %v772
        %876 = vmatpush1.msra.mxu0 %v769
        %877 = vmatprep.subr.mxu0 0.0
        %878 = vmatpush2.msra.mxu0 0.0
        %879 = vmatprep.subr.mxu0 0.0
        %880 = vmatpush2.msra.mxu0 0.0
        %881 = vmatprep.subr.mxu0 0.0
        %882 = vmatpush2.msra.mxu0 0.0
        %883 = vmatprep.subr.mxu0 0.0
        %884 = vmatpush2.msra.mxu0 0.0
        %885 = vmatprep.subr.mxu0 0.0
        %886 = vmatpush2.msra.mxu0 0.0
        %887 = vmatprep.subr.mxu0 0.0
        %888 = vmatpush2.msra.mxu0 0.0
        %889 = vmatprep.subr.mxu0 0.0
        %890 = vmatpush2.msra.mxu0 0.0
        %891 = vmatprep.subr.mxu0 0.0
        %892 = vmatpush2.msra.mxu0 0.0
        %893 = vmatprep.subr.mxu0 0.0
        %894 = vmatpush2.msra.mxu0 0.0
        %895 = vmatprep.subr.mxu0 0.0
        %896 = vmatpush2.msra.mxu0 0.0
        %897 = vmatprep.subr.mxu0 0.0
        %898 = vmatpush2.msra.mxu0 0.0
        %899 = vmatprep.subr.mxu0 0.0
        %900 = vmatpush2.msra.mxu0 0.0
        %901 = vmatprep.subr.mxu0 0.0
        %902 = vmatpush2.msra.mxu0 0.0
        %903 = vmatprep.subr.mxu0 0.0
        %904 = vmatpush2.msra.mxu0 0.0
        %905 = vmatprep.subr.mxu0 0.0
        %906 = vmatpush2.msra.mxu0 0.0
        %907 = vmatprep.subr.mxu0 0.0
        %908 = vmatpush2.msra.mxu0 0.0
        %909 = vmatprep.mubr.f32.mxu0 0.0
        %910 = vmatmul.mubr.f32.gmra.mxu0 %v760
        %v911 = vpop.f32.mrf.mxu0
        %v912 = vadd.f32 %v756, %v911
        %v913 = vpop.f32.mrf.mxu0
        %v914 = vadd.f32 %v756, %v913
        %915 = vdwg.mxu0
        %v916 = vxor.u32 %v841, 2147483648
        %v917 = vxor.u32 %v843, 2147483648
        %v918 = vxor.u32 %v912, 2147483648
        %v919 = vxor.u32 %v914, 2147483648
        %v920 = vmul.f32 %v916, 1.442695
        %v921 = vpow.pop %v920
        %v922 = vmul.f32 %v917, 1.442695
        %v923 = vpow.pop %v922
        %v924 = vmul.f32 %v918, 1.442695
        %v925 = vpow.pop %v924
        %v926 = vmul.f32 %v919, 1.442695
        %v927 = vpow.pop %v926
        %v928 = vadd.f32 %v921, 1.0
        %v929 = vadd.f32 %v923, 1.0
        %v930 = vadd.f32 %v925, 1.0
        %v931 = vadd.f32 %v927, 1.0
        %v932 = vrcp.pop %v928
        %v933 = vmul.f32 1.0, %v932
        %v934 = vrcp.pop %v929
        %v935 = vmul.f32 1.0, %v934
        %v936 = vrcp.pop %v930
        %v937 = vmul.f32 1.0, %v936
        %v938 = vrcp.pop %v931
        %v939 = vmul.f32 1.0, %v938
        %v944 = vrot.slane %v933, 4
        %v945 = vrot.slane %v935, 4
        %v946 = vrot.slane %v937, 4
        %v947 = vrot.slane %v939, 4
        %v952 = vsel %vm315, %v933, %v944
        %v953 = vsel %vm315, %v935, %v945
        %v954 = vsel %vm315, %v937, %v946
        %v955 = vsel %vm315, %v939, %v947
        %v956 = vunpack.c.l.bf16 %v250
        %v957 = vunpack.c.l.bf16 %v251
        %v959 = vsel %vm308, %v956, 0
        %v962 = vsel %vm308, %v957, 0
        %964 = vmatprep.subr.mxu0 0.0
        %965 = vmatpush1.msra.mxu0 0.0
        %966 = vmatprep.subr.mxu0 0.0
        %967 = vmatpush1.msra.mxu0 0.0
        %968 = vmatprep.subr.mxu0 0.0
        %969 = vmatpush1.msra.mxu0 0.0
        %970 = vmatprep.subr.mxu0 0.0
        %971 = vmatpush1.msra.mxu0 0.0
        %972 = vmatprep.subr.mxu0 0.0
        %973 = vmatpush1.msra.mxu0 0.0
        %974 = vmatprep.subr.mxu0 0.0
        %975 = vmatpush1.msra.mxu0 0.0
        %976 = vmatprep.subr.mxu0 0.0
        %977 = vmatpush1.msra.mxu0 0.0
        %978 = vmatprep.subr.mxu0 0.0
        %979 = vmatpush1.msra.mxu0 0.0
        %980 = vmatprep.subr.mxu0 0.0
        %981 = vmatpush1.msra.mxu0 0.0
        %982 = vmatprep.subr.mxu0 0.0
        %983 = vmatpush1.msra.mxu0 0.0
        %984 = vmatprep.subr.mxu0 0.0
        %985 = vmatpush1.msra.mxu0 0.0
        %986 = vmatprep.subr.mxu0 0.0
        %987 = vmatpush1.msra.mxu0 0.0
        %988 = vmatprep.subr.mxu0 0.0
        %989 = vmatpush1.msra.mxu0 0.0
        %990 = vmatprep.subr.mxu0 %v375
        %991 = vmatpush1.msra.mxu0 %v373
        %992 = vmatprep.subr.mxu0 %v369
        %993 = vmatpush1.msra.mxu0 %v367
        %994 = vmatprep.subr.mxu0 %v365
        %995 = vmatpush1.msra.mxu0 %v363
        %996 = vmatprep.subr.mxu0 0.0
        %997 = vmatpush2.msra.mxu0 0.0
        %998 = vmatprep.subr.mxu0 0.0
        %999 = vmatpush2.msra.mxu0 0.0
        %1000 = vmatprep.subr.mxu0 0.0
        %1001 = vmatpush2.msra.mxu0 0.0
        %1002 = vmatprep.subr.mxu0 0.0
        %1003 = vmatpush2.msra.mxu0 0.0
        %1004 = vmatprep.subr.mxu0 0.0
        %1005 = vmatpush2.msra.mxu0 0.0
        %1006 = vmatprep.subr.mxu0 0.0
        %1007 = vmatpush2.msra.mxu0 0.0
        %1008 = vmatprep.subr.mxu0 0.0
        %1009 = vmatpush2.msra.mxu0 0.0
        %1010 = vmatprep.subr.mxu0 0.0
        %1011 = vmatpush2.msra.mxu0 0.0
        %1012 = vmatprep.subr.mxu0 0.0
        %1013 = vmatpush2.msra.mxu0 0.0
        %1014 = vmatprep.subr.mxu0 0.0
        %1015 = vmatpush2.msra.mxu0 0.0
        %1016 = vmatprep.subr.mxu0 0.0
        %1017 = vmatpush2.msra.mxu0 0.0
        %1018 = vmatprep.subr.mxu0 0.0
        %1019 = vmatpush2.msra.mxu0 0.0
        %1020 = vmatprep.subr.mxu0 0.0
        %1021 = vmatpush2.msra.mxu0 0.0
        %1022 = vmatprep.subr.mxu0 0.0
        %1023 = vmatpush2.msra.mxu0 0.0
        %1024 = vmatprep.subr.mxu0 0.0
        %1025 = vmatpush2.msra.mxu0 0.0
        %1026 = vmatprep.subr.mxu0 0.0
        %1027 = vmatpush2.msra.mxu0 0.0
        %1028 = vmatprep.mubr.f32.mxu0 0.0
        %1029 = vmatmul.mubr.f32.gmra.mxu0 %v959
        %v1030 = vpop.f32.mrf.mxu0
        %v1031 = vadd.f32 0.0, %v1030
        %v1032 = vpop.f32.mrf.mxu0
        %v1033 = vadd.f32 0.0, %v1032
        %1034 = vmatprep.mubr.f32.mxu0 0.0
        %1035 = vmatmul.mubr.f32.gmra.mxu0 %v962
        %v1036 = vpop.f32.mrf.mxu0
        %v1037 = vadd.f32 0.0, %v1036
        %v1038 = vpop.f32.mrf.mxu0
        %v1039 = vadd.f32 0.0, %v1038
        %1040 = vdwg.mxu0
        %1041 = vmatprep.subr.mxu0 0.0
        %1042 = vmatpush1.msra.mxu0 0.0
        %1043 = vmatprep.subr.mxu0 0.0
        %1044 = vmatpush1.msra.mxu0 0.0
        %1045 = vmatprep.subr.mxu0 0.0
        %1046 = vmatpush1.msra.mxu0 0.0
        %1047 = vmatprep.subr.mxu0 0.0
        %1048 = vmatpush1.msra.mxu0 0.0
        %1049 = vmatprep.subr.mxu0 0.0
        %1050 = vmatpush1.msra.mxu0 0.0
        %1051 = vmatprep.subr.mxu0 0.0
        %1052 = vmatpush1.msra.mxu0 0.0
        %1053 = vmatprep.subr.mxu0 0.0
        %1054 = vmatpush1.msra.mxu0 0.0
        %1055 = vmatprep.subr.mxu0 0.0
        %1056 = vmatpush1.msra.mxu0 0.0
        %1057 = vmatprep.subr.mxu0 0.0
        %1058 = vmatpush1.msra.mxu0 0.0
        %1059 = vmatprep.subr.mxu0 0.0
        %1060 = vmatpush1.msra.mxu0 0.0
        %1061 = vmatprep.subr.mxu0 0.0
        %1062 = vmatpush1.msra.mxu0 0.0
        %1063 = vmatprep.subr.mxu0 0.0
        %1064 = vmatpush1.msra.mxu0 0.0
        %1065 = vmatprep.subr.mxu0 0.0
        %1066 = vmatpush1.msra.mxu0 0.0
        %1067 = vmatprep.subr.mxu0 %v426
        %1068 = vmatpush1.msra.mxu0 %v424
        %1069 = vmatprep.subr.mxu0 %v420
        %1070 = vmatpush1.msra.mxu0 %v418
        %1071 = vmatprep.subr.mxu0 %v416
        %1072 = vmatpush1.msra.mxu0 %v414
        %1073 = vmatprep.subr.mxu0 0.0
        %1074 = vmatpush2.msra.mxu0 0.0
        %1075 = vmatprep.subr.mxu0 0.0
        %1076 = vmatpush2.msra.mxu0 0.0
        %1077 = vmatprep.subr.mxu0 0.0
        %1078 = vmatpush2.msra.mxu0 0.0
        %1079 = vmatprep.subr.mxu0 0.0
        %1080 = vmatpush2.msra.mxu0 0.0
        %1081 = vmatprep.subr.mxu0 0.0
        %1082 = vmatpush2.msra.mxu0 0.0
        %1083 = vmatprep.subr.mxu0 0.0
        %1084 = vmatpush2.msra.mxu0 0.0
        %1085 = vmatprep.subr.mxu0 0.0
        %1086 = vmatpush2.msra.mxu0 0.0
        %1087 = vmatprep.subr.mxu0 0.0
        %1088 = vmatpush2.msra.mxu0 0.0
        %1089 = vmatprep.subr.mxu0 0.0
        %1090 = vmatpush2.msra.mxu0 0.0
        %1091 = vmatprep.subr.mxu0 0.0
        %1092 = vmatpush2.msra.mxu0 0.0
        %1093 = vmatprep.subr.mxu0 0.0
        %1094 = vmatpush2.msra.mxu0 0.0
        %1095 = vmatprep.subr.mxu0 0.0
        %1096 = vmatpush2.msra.mxu0 0.0
        %1097 = vmatprep.subr.mxu0 0.0
        %1098 = vmatpush2.msra.mxu0 0.0
        %1099 = vmatprep.subr.mxu0 0.0
        %1100 = vmatpush2.msra.mxu0 0.0
        %1101 = vmatprep.subr.mxu0 0.0
        %1102 = vmatpush2.msra.mxu0 0.0
        %1103 = vmatprep.subr.mxu0 0.0
        %1104 = vmatpush2.msra.mxu0 0.0
        %1105 = vmatprep.mubr.f32.mxu0 0.0
        %1106 = vmatmul.mubr.f32.gmra.mxu0 %v959
        %v1107 = vpop.f32.mrf.mxu0
        %v1108 = vadd.f32 0.0, %v1107
        %v1109 = vpop.f32.mrf.mxu0
        %v1110 = vadd.f32 0.0, %v1109
        %1111 = vmatprep.mubr.f32.mxu0 0.0
        %1112 = vmatmul.mubr.f32.gmra.mxu0 %v962
        %v1113 = vpop.f32.mrf.mxu0
        %v1114 = vadd.f32 0.0, %v1113
        %v1115 = vpop.f32.mrf.mxu0
        %v1116 = vadd.f32 0.0, %v1115
        %1117 = vdwg.mxu0
        %v1118 = vmul.f32 %v952, %v1031
        %v1119 = vmul.f32 %v953, %v1033
        %v1120 = vmul.f32 %v954, %v1108
        %v1121 = vmul.f32 %v955, %v1110
        %v1122 = vmul.f32 %v933, %v1037
        %v1123 = vmul.f32 %v935, %v1039
        %v1124 = vmul.f32 %v937, %v1114
        %v1125 = vmul.f32 %v939, %v1116
        %v1134 = vrot.slane %v1118, 4
        %v1135 = vrot.slane %v1119, 4
        %v1136 = vrot.slane %v1120, 4
        %v1137 = vrot.slane %v1121, 4
        %v1138 = vrot.slane %v1122, 4
        %v1139 = vsel %vm315, %v1134, %v1138
        %v1140 = vrot.slane %v1123, 4
        %v1141 = vsel %vm315, %v1135, %v1140
        %v1142 = vrot.slane %v1124, 4
        %v1143 = vsel %vm315, %v1136, %v1142
        %v1144 = vrot.slane %v1125, 4
        %v1145 = vsel %vm315, %v1137, %v1144
        %v1154 = vsel %vm315, %v676, %v1134
        %v1155 = vsel %vm315, %v678, %v1135
        %v1156 = vsel %vm315, %v747, %v1136
        %v1157 = vsel %vm315, %v749, %v1137
        %v1158 = vpack.c.bf16 %v1139, %v1154
        %v1159 = vpack.c.bf16 %v1141, %v1155
        %v1160 = vpack.c.bf16 %v1143, %v1156
        %v1161 = vpack.c.bf16 %v1145, %v1157
        %v1166 = vunpack.c.l.b16 %v1158
        %v1167 = vunpack.c.l.b16 %v1159
        %v1168 = vunpack.c.l.b16 %v1160
        %v1169 = vunpack.c.l.b16 %v1161
        %v1170 = vunpack.c.h.b16 %v1158
        %v1171 = vunpack.c.h.b16 %v1159
        %v1172 = vunpack.c.h.b16 %v1160
        %v1173 = vunpack.c.h.b16 %v1161
        %v1174 = vpack.c.b16 %v1167, %v1166
        %v1175 = vpack.c.b16 %v1169, %v1168
        %v1176 = vpack.c.b16 %v1171, %v1170
        %v1177 = vpack.c.b16 %v1173, %v1172
        %1182 = vst [vmem:[%s242] sm:$0xff] %v1174
        %1183 = vst [vmem:[%s242 + $0x8] sm:$0xff] %v1175
        %1184 = vst [vmem:[%s242 + $0x10] sm:$0xff] %v1176
        %1185 = vst [vmem:[%s242 + $0x18] sm:$0xff] %v1177
        %s1186 = sand.u32 %s104, 1
        %s1187 = scalar_lea.sflag [#allocation4], %s1186
        %s1188 = sand.u32 %s104, 1
        %s1189 = smul.addr %s1188, 32
        %s1190 = scalar_lea.vmem [#allocation8], %s1189
        // Predicated region
        $region45: #{tpu_custom_call.1} parent=31 // pred_check
          %p1191 = pneg %p114
        $region46: #{tpu_custom_call.1} parent=31 // pred_check_branch
          %1193 = sbr.rel (%p1191) target = $region48
        $region47: #{tpu_custom_call.1} parent=31 // pred_region
          %s1194 = smul.u32 4, %s23
          %s1196 = ssub.s32 512, 512
          %1197 = vsyncadd %s1187, %s1196
          %s1198 = smul.addr %s1194, 64
          %s1199 = scalar_lea.hbm %s3, %s1198
          %s1200 = sshll.u32 %s1190, 4
          %s1201 = int_to_ptr.vmem [resolvable:$true] %s1200
          %1206 = dma.vmem_to_hbm [thread:$0]  %s1201, 512, %s1199, %s1187, 256, 512, 16
        $region48: #{tpu_custom_call.1} parent=31 // pred_fallthru
          _
      $region32: #{tpu_custom_call.1} parent=5 // pred_fallthru
        _
      %p1207 = scmp.le.s32.totalorder 2, %s18
      // Predicated region
      $region49: #{tpu_custom_call.1} parent=5 // pred_check
        %p1208 = pneg %p1207
      $region50: #{tpu_custom_call.1} parent=5 // pred_check_branch
        %1210 = sbr.rel (%p1208) target = $region52
      $region51: #{tpu_custom_call.1} parent=5 // pred_region
        %s1211 = ssub.s32 %s18, 2
        // Predicated region
        $region53: #{tpu_custom_call.1} parent=51 // pred_check
          %p1212 = pneg %p120
        $region54: #{tpu_custom_call.1} parent=51 // pred_check_branch
          %1214 = sbr.rel (%p1212) target = $region56
        $region55: #{tpu_custom_call.1} parent=51 // pred_region
          %s1215 = sand.u32 %s105, 1
          %s1216 = scalar_lea.sflag [#allocation4], %s1215
          %s1217 = sand.u32 %s105, 1
          %s1218 = smul.addr %s1217, 32
          %s1219 = scalar_lea.vmem [#allocation8], %s1218
          %1220 = dma.done %s1216, 512
        $region56: #{tpu_custom_call.1} parent=51 // pred_fallthru
          _
      $region52: #{tpu_custom_call.1} parent=5 // pred_fallthru
        _
    $region6: #{tpu_custom_call.1} parent=1 // loop_footer
      %s22 = sadd.s32 1, %s18
    $region7: #{tpu_custom_call.1} parent=1 // loop_footer_branch
      %17 = sbr.rel target = $region3
    $region8: #{tpu_custom_call.1} parent=1 // loop_exit
      _
    %1221 = vsyncpa [#allocation3], 1
    %s1222 = scalar_lea.sflag [#allocation3], 1
    %1223 = vsyncpa %s1222, 1
    %1224 = vsyncpa [#allocation6], 1
    %s1225 = scalar_lea.sflag [#allocation6], 1
    %1226 = vsyncpa %s1225, 1
    %1227 = vsyncpa [#allocation4], 1
    %s1228 = scalar_lea.sflag [#allocation4], 1
    %1229 = vsyncpa %s1228, 1

</llo_original>
